<compile_context>
chip_gen: v6e
topology: v6e:2x2x1
jax: 0.10.0
libtpu: 0.0.40
codegen_flags: <defaults>
</compile_context>

<pallas_src>
import math

import jax
import jax.numpy as jnp
from jax.experimental import pallas as pl
from jax.experimental.pallas import tpu as pltpu


def _elman_kernel(x_ref, wi_ref, wh_ref, b_ref, h0_ref, out_ref, xp_scr):
    """One grid program == one full sequence (program 0 = out_p, 1 = out_h).

    x_ref  : (B, T, H)  input sequence, batch_first (leading seq axis squeezed)
    wi_ref : (H, H)     W_ih^T  (so x @ wi == x @ W_ih^T)
    wh_ref : (H, H)     W_hh^T
    b_ref  : (1, H)     b_ih + b_hh (fused bias)
    h0_ref : (1, H)     learnable initial hidden state for this sequence
    out_ref: (B, T, H)  output sequence
    xp_scr : (B, T, H)  VMEM scratch holding the hoisted input projection
    """
    B, T, H = out_ref.shape

    # ---- Hoisted input projection: one (B*T, H) @ (H, H) MXU matmul -------
    # (was T tiny per-step dots on the serial critical path)
    xp = jnp.dot(x_ref[...].reshape(B * T, H), wi_ref[...],
                 preferred_element_type=jnp.float32) + b_ref[...]
    xp_scr[...] = xp.reshape(B, T, H)

    # ---- Sequential Elman recurrence (the only inherently serial part) ----
    # T is small and static: fully unroll with static time indices (equivalent
    # to lax.fori_loop(..., unroll=True) at this trip count; keeps every slice
    # static). The hidden state is carried in vector registers.
    # TODO(synk): for long sequences switch this unrolled loop to lax.fori_loop.
    h = jnp.broadcast_to(h0_ref[...], (B, H)).astype(jnp.float32)
    for t in range(T):
        h = jnp.tanh(
            xp_scr[:, t, :]
            + jnp.dot(h, wh_ref[...], preferred_element_type=jnp.float32))
        out_ref[:, t, :] = h.astype(out_ref.dtype)


def elman_layer_forward(params, out_p, out_h):
    """Mirror of ElmanLayer.forward: returns (y_p, y_h), computed with shared
    RNN weights and per-input learnable initial states in ONE pallas_call."""
    assert out_p.shape == out_h.shape, "fused kernel expects matching (B, T, H)"
    B, T, H = out_p.shape

    x = jnp.stack([out_p, out_h], axis=0).astype(jnp.float32)       # (2, B, T, H)
    h0 = jnp.stack([params["h_0p"].reshape(1, H),
                    params["h_0h"].reshape(1, H)], axis=0)          # (2, 1, H)
    wi = jnp.transpose(params["w_ih"]).astype(jnp.float32)          # x @ W_ih^T
    wh = jnp.transpose(params["w_hh"]).astype(jnp.float32)          # h @ W_hh^T
    b = (params["b_ih"] + params["b_hh"]).reshape(1, H).astype(jnp.float32)

    y = pl.pallas_call(
        _elman_kernel,
        out_shape=jax.ShapeDtypeStruct((2, B, T, H), jnp.float32),
        grid_spec=pltpu.PrefetchScalarGridSpec(
            num_scalar_prefetch=0,
            grid=(2,),                               # program 0: out_p, 1: out_h
            in_specs=[
                pl.BlockSpec((None, B, T, H), lambda s: (s, 0, 0, 0)),  # x
                pl.BlockSpec((H, H), lambda s: (0, 0)),                 # W_ih^T
                pl.BlockSpec((H, H), lambda s: (0, 0)),                 # W_hh^T
                pl.BlockSpec((1, H), lambda s: (0, 0)),                 # bias
                pl.BlockSpec((None, 1, H), lambda s: (s, 0, 0)),        # h0 row
            ],
            out_specs=pl.BlockSpec((None, B, T, H), lambda s: (s, 0, 0, 0)),
            scratch_shapes=[pltpu.VMEM((B, T, H), jnp.float32)],
        ),
        compiler_params=pltpu.CompilerParams(
            # The two sequences are independent: on v7x each TensorCore takes
            # one; the recurrence inside a program remains sequential.
            dimension_semantics=("parallel",),
        ),
    )(x, wi, wh, b, h0)

    return y[0], y[1]


def init_params(key, hidden_size):
    """Matches PyTorch nn.RNN init: uniform(-k, k), k = 1/sqrt(hidden_size).
    h_0p / h_0h are zero-initialized (1, 1, H) parameters, as in __init__."""
    k = 1.0 / math.sqrt(hidden_size)
    k1, k2, k3, k4 = jax.random.split(key, 4)
    return {
        "w_ih": jax.random.uniform(k1, (hidden_size, hidden_size),
                                   jnp.float32, -k, k),
        "w_hh": jax.random.uniform(k2, (hidden_size, hidden_size),
                                   jnp.float32, -k, k),
        "b_ih": jax.random.uniform(k3, (hidden_size,), jnp.float32, -k, k),
        "b_hh": jax.random.uniform(k4, (hidden_size,), jnp.float32, -k, k),
        "h_0p": jnp.zeros((1, 1, hidden_size), jnp.float32),
        "h_0h": jnp.zeros((1, 1, hidden_size), jnp.float32),
    }


def _reference_rnn(x_btH, w_ih, w_hh, b_ih, b_hh, h0_bH):
    """Pure-JAX reference of nn.RNN (tanh, single layer, batch_first)."""
    def step(h, x_t):
        h_new = jnp.tanh(x_t @ w_ih.T + b_ih + h @ w_hh.T + b_hh)
        return h_new, h_new
    _, ys = jax.lax.scan(step, h0_bH, jnp.transpose(x_btH, (1, 0, 2)))
    return jnp.transpose(ys, (1, 0, 2))


if __name__ == "__main__":
    B, T, H = 2, 8, 32   # batch, seq_len, hidden_size (args.hidden_size = 32)

    key = jax.random.PRNGKey(0)
    kp, kx1, kx2, kh1, kh2 = jax.random.split(key, 5)
    params = init_params(kp, H)

    out_p = jax.random.normal(kx1, (B, T, H), jnp.float32)
    out_h = jax.random.normal(kx2, (B, T, H), jnp.float32)

    fwd = jax.jit(elman_layer_forward)
    y_p, y_h = fwd(params, out_p, out_h)
    y_p = jax.block_until_ready(y_p)
    y_h = jax.block_until_ready(y_h)

    def check(yp, yh, prm):
        h0p = jnp.broadcast_to(prm["h_0p"].reshape(1, H), (B, H))
        h0h = jnp.broadcast_to(prm["h_0h"].reshape(1, H), (B, H))
        rp = _reference_rnn(out_p, prm["w_ih"], prm["w_hh"],
                            prm["b_ih"], prm["b_hh"], h0p)
        rh = _reference_rnn(out_h, prm["w_ih"], prm["w_hh"],
                            prm["b_ih"], prm["b_hh"], h0h)
        assert yp.shape == (B, T, H) and yh.shape == (B, T, H)
        assert jnp.allclose(yp, rp, atol=1e-5, rtol=1e-5)
        assert jnp.allclose(yh, rh, atol=1e-5, rtol=1e-5)

    # 1) Faithful init (zero h_0p / h_0h, as in the module's __init__).
    check(y_p, y_h, params)

    # 2) Also exercise the learnable-h0 path with non-zero values
    #    (as would occur after training).
    params2 = dict(params)
    params2["h_0p"] = 0.1 * jax.random.normal(kh1, (1, 1, H), jnp.float32)
    params2["h_0h"] = 0.1 * jax.random.normal(kh2, (1, 1, H), jnp.float32)
    y_p2, y_h2 = fwd(params2, out_p, out_h)
    y_p2 = jax.block_until_ready(y_p2)
    y_h2 = jax.block_until_ready(y_h2)
    check(y_p2, y_h2, params2)

    print("KERNEL_OK")
</pallas_src>

<mosaic_0001>
module attributes {stable_mosaic.version = 11 : i64} {
  func.func @_elman_kernel(%arg0: i32, %arg1: memref<1x2x8x32xf32, #tpu.memory_space<vmem>>, %arg2: memref<32x32xf32, #tpu.memory_space<vmem>>, %arg3: memref<32x32xf32, #tpu.memory_space<vmem>>, %arg4: memref<1x32xf32, #tpu.memory_space<vmem>>, %arg5: memref<1x1x32xf32, #tpu.memory_space<vmem>>, %arg6: memref<1x2x8x32xf32, #tpu.memory_space<vmem>>, %arg7: memref<2x8x32xf32, #tpu.memory_space<vmem>>) attributes {dimension_semantics = [#tpu.dimension_semantics<parallel>], iteration_bounds = array<i64: 2>, scalar_prefetch = 0 : i64, scratch_operands = 1 : i64, tpu.core_type = #tpu.core_type<tc>, window_params = [{transform_indices = @transform_0, window_bounds = array<i64: 1, 2, 8, 32>}, {pipeline_mode = #tpu.pipeline_mode<synchronous>, transform_indices = @transform_1, window_bounds = array<i64: 32, 32>}, {pipeline_mode = #tpu.pipeline_mode<synchronous>, transform_indices = @transform_2, window_bounds = array<i64: 32, 32>}, {pipeline_mode = #tpu.pipeline_mode<synchronous>, transform_indices = @transform_3, window_bounds = array<i64: 1, 32>}, {transform_indices = @transform_4, window_bounds = array<i64: 1, 1, 32>}, {transform_indices = @transform_5, window_bounds = array<i64: 1, 2, 8, 32>}]} {
    %c0 = arith.constant 0 : index
    %c0_0 = arith.constant 0 : index
    %c0_1 = arith.constant 0 : index
    %c0_2 = arith.constant 0 : index
    %0 = vector.load %arg1[%c0, %c0_0, %c0_1, %c0_2] : memref<1x2x8x32xf32, #tpu.memory_space<vmem>>, vector<1x2x8x32xf32>
    %1 = vector.shape_cast %0 : vector<1x2x8x32xf32> to vector<2x8x32xf32>
    %2 = vector.shape_cast %1 : vector<2x8x32xf32> to vector<16x32xf32>
    %c0_3 = arith.constant 0 : index
    %c0_4 = arith.constant 0 : index
    %3 = vector.load %arg2[%c0_3, %c0_4] : memref<32x32xf32, #tpu.memory_space<vmem>>, vector<32x32xf32>
    %cst = arith.constant dense<0.000000e+00> : vector<16x32xf32>
    %4 = tpu.matmul %2, %3, %cst {dimension_numbers = #tpu.dot_dimension_numbers<[1], [0], [0], [1], [0, 0, 1, 1], [], []>} : vector<16x32xf32>, vector<32x32xf32>, vector<16x32xf32> -> vector<16x32xf32>
    %c0_5 = arith.constant 0 : index
    %c0_6 = arith.constant 0 : index
    %5 = vector.load %arg4[%c0_5, %c0_6] : memref<1x32xf32, #tpu.memory_space<vmem>>, vector<1x32xf32>
    %6 = vector.broadcast %5 : vector<1x32xf32> to vector<16x32xf32>
    %7 = arith.addf %4, %6 : vector<16x32xf32>
    %8 = vector.shape_cast %7 : vector<16x32xf32> to vector<2x8x32xf32>
    %c0_7 = arith.constant 0 : index
    %c0_8 = arith.constant 0 : index
    %c0_9 = arith.constant 0 : index
    %9 = vector.load %arg7[%c0_7, %c0_8, %c0_9] : memref<2x8x32xf32, #tpu.memory_space<vmem>>, vector<2x8x32xf32>
    tpu.vector_store %arg7[%c0_7, %c0_8, %c0_9], %8 {strides = array<i32>} : memref<2x8x32xf32, #tpu.memory_space<vmem>>, vector<2x8x32xf32>,
    %c0_10 = arith.constant 0 : index
    %c0_11 = arith.constant 0 : index
    %c0_12 = arith.constant 0 : index
    %10 = vector.load %arg5[%c0_10, %c0_11, %c0_12] : memref<1x1x32xf32, #tpu.memory_space<vmem>>, vector<1x1x32xf32>
    %11 = vector.shape_cast %10 : vector<1x1x32xf32> to vector<1x32xf32>
    %12 = vector.shape_cast %11 : vector<1x32xf32> to vector<1x32xf32>
    %13 = vector.broadcast %12 : vector<1x32xf32> to vector<2x32xf32>
    %c0_13 = arith.constant 0 : index
    %c0_14 = arith.constant 0 : index
    %c0_15 = arith.constant 0 : index
    %14 = vector.load %arg7[%c0_13, %c0_14, %c0_15] : memref<2x8x32xf32, #tpu.memory_space<vmem>>, vector<2x1x32xf32>
    %15 = vector.shape_cast %14 : vector<2x1x32xf32> to vector<2x32xf32>
    %c0_16 = arith.constant 0 : index
    %c0_17 = arith.constant 0 : index
    %16 = vector.load %arg3[%c0_16, %c0_17] : memref<32x32xf32, #tpu.memory_space<vmem>>, vector<32x32xf32>
    %cst_18 = arith.constant dense<0.000000e+00> : vector<2x32xf32>
    %17 = tpu.matmul %13, %16, %cst_18 {dimension_numbers = #tpu.dot_dimension_numbers<[1], [0], [0], [1], [0, 0, 1, 1], [], []>} : vector<2x32xf32>, vector<32x32xf32>, vector<2x32xf32> -> vector<2x32xf32>
    %18 = arith.addf %15, %17 : vector<2x32xf32>
    %19 = math.tanh %18 : vector<2x32xf32>
    %c0_19 = arith.constant 0 : index
    %c0_20 = arith.constant 0 : index
    %c0_21 = arith.constant 0 : index
    %c0_22 = arith.constant 0 : index
    %20 = vector.load %arg6[%c0_19, %c0_20, %c0_21, %c0_22] : memref<1x2x8x32xf32, #tpu.memory_space<vmem>>, vector<1x2x1x32xf32>
    %21 = vector.shape_cast %20 : vector<1x2x1x32xf32> to vector<2x32xf32>
    %22 = vector.shape_cast %19 : vector<2x32xf32> to vector<1x2x1x32xf32>
    tpu.vector_store %arg6[%c0_19, %c0_20, %c0_21, %c0_22], %22 {strides = array<i32>} : memref<1x2x8x32xf32, #tpu.memory_space<vmem>>, vector<1x2x1x32xf32>,
    %c0_23 = arith.constant 0 : index
    %c1 = arith.constant 1 : index
    %c0_24 = arith.constant 0 : index
    %23 = vector.load %arg7[%c0_23, %c1, %c0_24] : memref<2x8x32xf32, #tpu.memory_space<vmem>>, vector<2x1x32xf32>
    %24 = vector.shape_cast %23 : vector<2x1x32xf32> to vector<2x32xf32>
    %c0_25 = arith.constant 0 : index
    %c0_26 = arith.constant 0 : index
    %25 = vector.load %arg3[%c0_25, %c0_26] : memref<32x32xf32, #tpu.memory_space<vmem>>, vector<32x32xf32>
    %cst_27 = arith.constant dense<0.000000e+00> : vector<2x32xf32>
    %26 = tpu.matmul %19, %25, %cst_27 {dimension_numbers = #tpu.dot_dimension_numbers<[1], [0], [0], [1], [0, 0, 1, 1], [], []>} : vector<2x32xf32>, vector<32x32xf32>, vector<2x32xf32> -> vector<2x32xf32>
    %27 = arith.addf %24, %26 : vector<2x32xf32>
    %28 = math.tanh %27 : vector<2x32xf32>
    %c0_28 = arith.constant 0 : index
    %c0_29 = arith.constant 0 : index
    %c1_30 = arith.constant 1 : index
    %c0_31 = arith.constant 0 : index
    %29 = vector.load %arg6[%c0_28, %c0_29, %c1_30, %c0_31] : memref<1x2x8x32xf32, #tpu.memory_space<vmem>>, vector<1x2x1x32xf32>
    %30 = vector.shape_cast %29 : vector<1x2x1x32xf32> to vector<2x32xf32>
    %31 = vector.shape_cast %28 : vector<2x32xf32> to vector<1x2x1x32xf32>
    tpu.vector_store %arg6[%c0_28, %c0_29, %c1_30, %c0_31], %31 {strides = array<i32>} : memref<1x2x8x32xf32, #tpu.memory_space<vmem>>, vector<1x2x1x32xf32>,
    %c0_32 = arith.constant 0 : index
    %c2 = arith.constant 2 : index
    %c0_33 = arith.constant 0 : index
    %32 = vector.load %arg7[%c0_32, %c2, %c0_33] : memref<2x8x32xf32, #tpu.memory_space<vmem>>, vector<2x1x32xf32>
    %33 = vector.shape_cast %32 : vector<2x1x32xf32> to vector<2x32xf32>
    %c0_34 = arith.constant 0 : index
    %c0_35 = arith.constant 0 : index
    %34 = vector.load %arg3[%c0_34, %c0_35] : memref<32x32xf32, #tpu.memory_space<vmem>>, vector<32x32xf32>
    %cst_36 = arith.constant dense<0.000000e+00> : vector<2x32xf32>
    %35 = tpu.matmul %28, %34, %cst_36 {dimension_numbers = #tpu.dot_dimension_numbers<[1], [0], [0], [1], [0, 0, 1, 1], [], []>} : vector<2x32xf32>, vector<32x32xf32>, vector<2x32xf32> -> vector<2x32xf32>
    %36 = arith.addf %33, %35 : vector<2x32xf32>
    %37 = math.tanh %36 : vector<2x32xf32>
    %c0_37 = arith.constant 0 : index
    %c0_38 = arith.constant 0 : index
    %c2_39 = arith.constant 2 : index
    %c0_40 = arith.constant 0 : index
    %38 = vector.load %arg6[%c0_37, %c0_38, %c2_39, %c0_40] : memref<1x2x8x32xf32, #tpu.memory_space<vmem>>, vector<1x2x1x32xf32>
    %39 = vector.shape_cast %38 : vector<1x2x1x32xf32> to vector<2x32xf32>
    %40 = vector.shape_cast %37 : vector<2x32xf32> to vector<1x2x1x32xf32>
    tpu.vector_store %arg6[%c0_37, %c0_38, %c2_39, %c0_40], %40 {strides = array<i32>} : memref<1x2x8x32xf32, #tpu.memory_space<vmem>>, vector<1x2x1x32xf32>,
    %c0_41 = arith.constant 0 : index
    %c3 = arith.constant 3 : index
    %c0_42 = arith.constant 0 : index
    %41 = vector.load %arg7[%c0_41, %c3, %c0_42] : memref<2x8x32xf32, #tpu.memory_space<vmem>>, vector<2x1x32xf32>
    %42 = vector.shape_cast %41 : vector<2x1x32xf32> to vector<2x32xf32>
    %c0_43 = arith.constant 0 : index
    %c0_44 = arith.constant 0 : index
    %43 = vector.load %arg3[%c0_43, %c0_44] : memref<32x32xf32, #tpu.memory_space<vmem>>, vector<32x32xf32>
    %cst_45 = arith.constant dense<0.000000e+00> : vector<2x32xf32>
    %44 = tpu.matmul %37, %43, %cst_45 {dimension_numbers = #tpu.dot_dimension_numbers<[1], [0], [0], [1], [0, 0, 1, 1], [], []>} : vector<2x32xf32>, vector<32x32xf32>, vector<2x32xf32> -> vector<2x32xf32>
    %45 = arith.addf %42, %44 : vector<2x32xf32>
    %46 = math.tanh %45 : vector<2x32xf32>
    %c0_46 = arith.constant 0 : index
    %c0_47 = arith.constant 0 : index
    %c3_48 = arith.constant 3 : index
    %c0_49 = arith.constant 0 : index
    %47 = vector.load %arg6[%c0_46, %c0_47, %c3_48, %c0_49] : memref<1x2x8x32xf32, #tpu.memory_space<vmem>>, vector<1x2x1x32xf32>
    %48 = vector.shape_cast %47 : vector<1x2x1x32xf32> to vector<2x32xf32>
    %49 = vector.shape_cast %46 : vector<2x32xf32> to vector<1x2x1x32xf32>
    tpu.vector_store %arg6[%c0_46, %c0_47, %c3_48, %c0_49], %49 {strides = array<i32>} : memref<1x2x8x32xf32, #tpu.memory_space<vmem>>, vector<1x2x1x32xf32>,
    %c0_50 = arith.constant 0 : index
    %c4 = arith.constant 4 : index
    %c0_51 = arith.constant 0 : index
    %50 = vector.load %arg7[%c0_50, %c4, %c0_51] : memref<2x8x32xf32, #tpu.memory_space<vmem>>, vector<2x1x32xf32>
    %51 = vector.shape_cast %50 : vector<2x1x32xf32> to vector<2x32xf32>
    %c0_52 = arith.constant 0 : index
    %c0_53 = arith.constant 0 : index
    %52 = vector.load %arg3[%c0_52, %c0_53] : memref<32x32xf32, #tpu.memory_space<vmem>>, vector<32x32xf32>
    %cst_54 = arith.constant dense<0.000000e+00> : vector<2x32xf32>
    %53 = tpu.matmul %46, %52, %cst_54 {dimension_numbers = #tpu.dot_dimension_numbers<[1], [0], [0], [1], [0, 0, 1, 1], [], []>} : vector<2x32xf32>, vector<32x32xf32>, vector<2x32xf32> -> vector<2x32xf32>
    %54 = arith.addf %51, %53 : vector<2x32xf32>
    %55 = math.tanh %54 : vector<2x32xf32>
    %c0_55 = arith.constant 0 : index
    %c0_56 = arith.constant 0 : index
    %c4_57 = arith.constant 4 : index
    %c0_58 = arith.constant 0 : index
    %56 = vector.load %arg6[%c0_55, %c0_56, %c4_57, %c0_58] : memref<1x2x8x32xf32, #tpu.memory_space<vmem>>, vector<1x2x1x32xf32>
    %57 = vector.shape_cast %56 : vector<1x2x1x32xf32> to vector<2x32xf32>
    %58 = vector.shape_cast %55 : vector<2x32xf32> to vector<1x2x1x32xf32>
    tpu.vector_store %arg6[%c0_55, %c0_56, %c4_57, %c0_58], %58 {strides = array<i32>} : memref<1x2x8x32xf32, #tpu.memory_space<vmem>>, vector<1x2x1x32xf32>,
    %c0_59 = arith.constant 0 : index
    %c5 = arith.constant 5 : index
    %c0_60 = arith.constant 0 : index
    %59 = vector.load %arg7[%c0_59, %c5, %c0_60] : memref<2x8x32xf32, #tpu.memory_space<vmem>>, vector<2x1x32xf32>
    %60 = vector.shape_cast %59 : vector<2x1x32xf32> to vector<2x32xf32>
    %c0_61 = arith.constant 0 : index
    %c0_62 = arith.constant 0 : index
    %61 = vector.load %arg3[%c0_61, %c0_62] : memref<32x32xf32, #tpu.memory_space<vmem>>, vector<32x32xf32>
    %cst_63 = arith.constant dense<0.000000e+00> : vector<2x32xf32>
    %62 = tpu.matmul %55, %61, %cst_63 {dimension_numbers = #tpu.dot_dimension_numbers<[1], [0], [0], [1], [0, 0, 1, 1], [], []>} : vector<2x32xf32>, vector<32x32xf32>, vector<2x32xf32> -> vector<2x32xf32>
    %63 = arith.addf %60, %62 : vector<2x32xf32>
    %64 = math.tanh %63 : vector<2x32xf32>
    %c0_64 = arith.constant 0 : index
    %c0_65 = arith.constant 0 : index
    %c5_66 = arith.constant 5 : index
    %c0_67 = arith.constant 0 : index
    %65 = vector.load %arg6[%c0_64, %c0_65, %c5_66, %c0_67] : memref<1x2x8x32xf32, #tpu.memory_space<vmem>>, vector<1x2x1x32xf32>
    %66 = vector.shape_cast %65 : vector<1x2x1x32xf32> to vector<2x32xf32>
    %67 = vector.shape_cast %64 : vector<2x32xf32> to vector<1x2x1x32xf32>
    tpu.vector_store %arg6[%c0_64, %c0_65, %c5_66, %c0_67], %67 {strides = array<i32>} : memref<1x2x8x32xf32, #tpu.memory_space<vmem>>, vector<1x2x1x32xf32>,
    %c0_68 = arith.constant 0 : index
    %c6 = arith.constant 6 : index
    %c0_69 = arith.constant 0 : index
    %68 = vector.load %arg7[%c0_68, %c6, %c0_69] : memref<2x8x32xf32, #tpu.memory_space<vmem>>, vector<2x1x32xf32>
    %69 = vector.shape_cast %68 : vector<2x1x32xf32> to vector<2x32xf32>
    %c0_70 = arith.constant 0 : index
    %c0_71 = arith.constant 0 : index
    %70 = vector.load %arg3[%c0_70, %c0_71] : memref<32x32xf32, #tpu.memory_space<vmem>>, vector<32x32xf32>
    %cst_72 = arith.constant dense<0.000000e+00> : vector<2x32xf32>
    %71 = tpu.matmul %64, %70, %cst_72 {dimension_numbers = #tpu.dot_dimension_numbers<[1], [0], [0], [1], [0, 0, 1, 1], [], []>} : vector<2x32xf32>, vector<32x32xf32>, vector<2x32xf32> -> vector<2x32xf32>
    %72 = arith.addf %69, %71 : vector<2x32xf32>
    %73 = math.tanh %72 : vector<2x32xf32>
    %c0_73 = arith.constant 0 : index
    %c0_74 = arith.constant 0 : index
    %c6_75 = arith.constant 6 : index
    %c0_76 = arith.constant 0 : index
    %74 = vector.load %arg6[%c0_73, %c0_74, %c6_75, %c0_76] : memref<1x2x8x32xf32, #tpu.memory_space<vmem>>, vector<1x2x1x32xf32>
    %75 = vector.shape_cast %74 : vector<1x2x1x32xf32> to vector<2x32xf32>
    %76 = vector.shape_cast %73 : vector<2x32xf32> to vector<1x2x1x32xf32>
    tpu.vector_store %arg6[%c0_73, %c0_74, %c6_75, %c0_76], %76 {strides = array<i32>} : memref<1x2x8x32xf32, #tpu.memory_space<vmem>>, vector<1x2x1x32xf32>,
    %c0_77 = arith.constant 0 : index
    %c7 = arith.constant 7 : index
    %c0_78 = arith.constant 0 : index
    %77 = vector.load %arg7[%c0_77, %c7, %c0_78] : memref<2x8x32xf32, #tpu.memory_space<vmem>>, vector<2x1x32xf32>
    %78 = vector.shape_cast %77 : vector<2x1x32xf32> to vector<2x32xf32>
    %c0_79 = arith.constant 0 : index
    %c0_80 = arith.constant 0 : index
    %79 = vector.load %arg3[%c0_79, %c0_80] : memref<32x32xf32, #tpu.memory_space<vmem>>, vector<32x32xf32>
    %cst_81 = arith.constant dense<0.000000e+00> : vector<2x32xf32>
    %80 = tpu.matmul %73, %79, %cst_81 {dimension_numbers = #tpu.dot_dimension_numbers<[1], [0], [0], [1], [0, 0, 1, 1], [], []>} : vector<2x32xf32>, vector<32x32xf32>, vector<2x32xf32> -> vector<2x32xf32>
    %81 = arith.addf %78, %80 : vector<2x32xf32>
    %82 = math.tanh %81 : vector<2x32xf32>
    %c0_82 = arith.constant 0 : index
    %c0_83 = arith.constant 0 : index
    %c7_84 = arith.constant 7 : index
    %c0_85 = arith.constant 0 : index
    %83 = vector.load %arg6[%c0_82, %c0_83, %c7_84, %c0_85] : memref<1x2x8x32xf32, #tpu.memory_space<vmem>>, vector<1x2x1x32xf32>
    %84 = vector.shape_cast %83 : vector<1x2x1x32xf32> to vector<2x32xf32>
    %85 = vector.shape_cast %82 : vector<2x32xf32> to vector<1x2x1x32xf32>
    tpu.vector_store %arg6[%c0_82, %c0_83, %c7_84, %c0_85], %85 {strides = array<i32>} : memref<1x2x8x32xf32, #tpu.memory_space<vmem>>, vector<1x2x1x32xf32>,
    return
  }
  func.func @transform_0(%arg0: i32) -> (i32, i32, i32, i32) {
    %c0_i32 = arith.constant 0 : i32
    %c0_i32_0 = arith.constant 0 : i32
    %c0_i32_1 = arith.constant 0 : i32
    %c0_i32_2 = arith.constant 0 : i32
    return %arg0, %c0_i32, %c0_i32_0, %c0_i32_1 : i32, i32, i32, i32
  }
  func.func @transform_1(%arg0: i32) -> (i32, i32) {
    %c0_i32 = arith.constant 0 : i32
    %c0_i32_0 = arith.constant 0 : i32
    %c0_i32_1 = arith.constant 0 : i32
    return %c0_i32, %c0_i32_0 : i32, i32
  }
  func.func @transform_2(%arg0: i32) -> (i32, i32) {
    %c0_i32 = arith.constant 0 : i32
    %c0_i32_0 = arith.constant 0 : i32
    %c0_i32_1 = arith.constant 0 : i32
    return %c0_i32, %c0_i32_0 : i32, i32
  }
  func.func @transform_3(%arg0: i32) -> (i32, i32) {
    %c0_i32 = arith.constant 0 : i32
    %c0_i32_0 = arith.constant 0 : i32
    %c0_i32_1 = arith.constant 0 : i32
    return %c0_i32, %c0_i32_0 : i32, i32
  }
  func.func @transform_4(%arg0: i32) -> (i32, i32, i32) {
    %c0_i32 = arith.constant 0 : i32
    %c0_i32_0 = arith.constant 0 : i32
    %c0_i32_1 = arith.constant 0 : i32
    return %arg0, %c0_i32, %c0_i32_0 : i32, i32, i32
  }
  func.func @transform_5(%arg0: i32) -> (i32, i32, i32, i32) {
    %c0_i32 = arith.constant 0 : i32
    %c0_i32_0 = arith.constant 0 : i32
    %c0_i32_1 = arith.constant 0 : i32
    %c0_i32_2 = arith.constant 0 : i32
    return %arg0, %c0_i32, %c0_i32_0, %c0_i32_1 : i32, i32, i32, i32
  }
}

</mosaic_0001>

<llo_original>
// kernel: elman_layer_forward.1
$region0: #{elman_layer_forward.1}
  #allocation0 [shape = 'u32[]', space=smem, size = 0x4, offset = 0x4, fixed_abs, tag = 'smem constant byte address 0x4 - core index']
  #allocation1 [shape = 'u32[144,128]{1,0:T(1,128)}', space=vmem, size = 0x12000, scoped, tag = 'internal scratch']
  #allocation2 [shape = 'f32[2,8,32]{2,1,0:T(8,128)}', space=vmem, size = 0x2000, scoped, tag = 'scratch operand']
  %s0 = inlined_call_operand.vmem [shape: f32[2,2,8,32], index: 0, kind: input, shape index: {}]
  %s1 = inlined_call_operand.vmem [shape: f32[32,32], index: 1, kind: input, shape index: {}]
  %s2 = inlined_call_operand.vmem [shape: f32[32,32], index: 2, kind: input, shape index: {}]
  %s3 = inlined_call_operand.vmem [shape: f32[1,32], index: 3, kind: input, shape index: {}]
  %s4 = inlined_call_operand.vmem [shape: f32[2,1,32], index: 4, kind: input, shape index: {}]
  %s5 = inlined_call_operand.vmem [shape: f32[2,2,8,32], index: 5, kind: output, shape index: {}]
  %s6 = sld [smem:[#allocation0]]
  $region53: #{elman_layer_forward.1} parent=0
    _
  %s8 = ssub.s32 1, %s6
  %s9 = scalar_select 0, %s8, %s6
  loop: start=0, step=1, limit=4
  $region2: #{elman_layer_forward.1} parent=0 // loop_pre_header
    _
  $region3: #{elman_layer_forward.1} parent=0 // loop_header
    %s11 = sphi 0, %s15
    %p12 = scmp.ge.s32.totalorder %s11, 4
    %s21 = sphi 0, %s23
    %s24 = sphi 0, %s21
    %s25 = sphi 0, %s24
    %s41 = sphi 0, %s25
    %s45 = sphi 0, %s45
    %s47 = sphi 0, %s45
    %s48 = sphi 0, %s47
    %s62 = sphi 0, %s48
    %s66 = sphi 0, %s66
    %s68 = sphi 0, %s66
    %s69 = sphi 0, %s68
    %s83 = sphi 0, %s69
    %s87 = sphi 0, %s87
    %s89 = sphi 0, %s87
    %s90 = sphi 0, %s89
    %s104 = sphi 0, %s90
    %s110 = sphi 0, %s112
    %s113 = sphi 0, %s110
    %s114 = sphi 0, %s113
    %s130 = sphi 0, %s114
    %s136 = sphi 0, %s138
    %s139 = sphi 0, %s136
    %s140 = sphi 0, %s139
    %s156 = sphi 0, %s140
  $region4: #{elman_layer_forward.1} parent=0 // loop_header_branch
    %14 = sbr.rel (%p12) target = $region8
  $region5: #{elman_layer_forward.1} parent=0 // loop_body
    %s16 = ssub.s32 %s11, 1
    %s17 = ssub.s32 %s11, 2
    %s18 = sadd.s32 %s11, 1
    %s19 = ssub.s32 %s11, %s18
    %p20 = scmp.eq.s32.totalorder %s19, 0
    %s22 = sadd.s32 %s21, 1
    %s23 = scalar_select %p20, %s21, %s22
    %p26 = pneg %p20
    %p27 = scmp.eq.s32.totalorder %s11, 1
    %p28 = por %p26, %p27
    %p29 = scmp.ne.s32.totalorder %s21, %s24
    %p30 = scmp.eq.s32.totalorder %s11, 0
    %p31 = por %p29, %p30
    %p32 = scmp.ne.s32.totalorder %s21, %s24
    %p33 = scmp.eq.s32.totalorder %s16, 1
    %p34 = por %p32, %p33
    %p35 = scmp.ne.s32.totalorder %s24, %s25
    %p36 = scmp.eq.s32.totalorder %s16, 0
    %p37 = por %p35, %p36
    %p38 = scmp.ne.s32.totalorder %s24, %s25
    %p39 = scmp.eq.s32.totalorder %s17, 1
    %p40 = por %p38, %p39
    %p42 = scmp.ne.s32.totalorder %s25, %s41
    %p43 = scmp.eq.s32.totalorder %s17, 0
    %p44 = por %p42, %p43
    %s46 = sadd.s32 %s45, 1
    %p49 = scmp.eq.s32.totalorder %s11, 1
    %p50 = scmp.ne.s32.totalorder %s45, %s47
    %p51 = scmp.eq.s32.totalorder %s11, 0
    %p52 = por %p50, %p51
    %p53 = scmp.ne.s32.totalorder %s45, %s47
    %p54 = scmp.eq.s32.totalorder %s16, 1
    %p55 = por %p53, %p54
    %p56 = scmp.ne.s32.totalorder %s47, %s48
    %p57 = scmp.eq.s32.totalorder %s16, 0
    %p58 = por %p56, %p57
    %p59 = scmp.ne.s32.totalorder %s47, %s48
    %p60 = scmp.eq.s32.totalorder %s17, 1
    %p61 = por %p59, %p60
    %p63 = scmp.ne.s32.totalorder %s48, %s62
    %p64 = scmp.eq.s32.totalorder %s17, 0
    %p65 = por %p63, %p64
    %s67 = sadd.s32 %s66, 1
    %p70 = scmp.eq.s32.totalorder %s11, 1
    %p71 = scmp.ne.s32.totalorder %s66, %s68
    %p72 = scmp.eq.s32.totalorder %s11, 0
    %p73 = por %p71, %p72
    %p74 = scmp.ne.s32.totalorder %s66, %s68
    %p75 = scmp.eq.s32.totalorder %s16, 1
    %p76 = por %p74, %p75
    %p77 = scmp.ne.s32.totalorder %s68, %s69
    %p78 = scmp.eq.s32.totalorder %s16, 0
    %p79 = por %p77, %p78
    %p80 = scmp.ne.s32.totalorder %s68, %s69
    %p81 = scmp.eq.s32.totalorder %s17, 1
    %p82 = por %p80, %p81
    %p84 = scmp.ne.s32.totalorder %s69, %s83
    %p85 = scmp.eq.s32.totalorder %s17, 0
    %p86 = por %p84, %p85
    %s88 = sadd.s32 %s87, 1
    %p91 = scmp.eq.s32.totalorder %s11, 1
    %p92 = scmp.ne.s32.totalorder %s87, %s89
    %p93 = scmp.eq.s32.totalorder %s11, 0
    %p94 = por %p92, %p93
    %p95 = scmp.ne.s32.totalorder %s87, %s89
    %p96 = scmp.eq.s32.totalorder %s16, 1
    %p97 = por %p95, %p96
    %p98 = scmp.ne.s32.totalorder %s89, %s90
    %p99 = scmp.eq.s32.totalorder %s16, 0
    %p100 = por %p98, %p99
    %p101 = scmp.ne.s32.totalorder %s89, %s90
    %p102 = scmp.eq.s32.totalorder %s17, 1
    %p103 = por %p101, %p102
    %p105 = scmp.ne.s32.totalorder %s90, %s104
    %p106 = scmp.eq.s32.totalorder %s17, 0
    %p107 = por %p105, %p106
    %s108 = ssub.s32 %s11, %s18
    %p109 = scmp.eq.s32.totalorder %s108, 0
    %s111 = sadd.s32 %s110, 1
    %s112 = scalar_select %p109, %s110, %s111
    %p115 = pneg %p109
    %p116 = scmp.eq.s32.totalorder %s11, 1
    %p117 = por %p115, %p116
    %p118 = scmp.ne.s32.totalorder %s110, %s113
    %p119 = scmp.eq.s32.totalorder %s11, 0
    %p120 = por %p118, %p119
    %p121 = scmp.ne.s32.totalorder %s110, %s113
    %p122 = scmp.eq.s32.totalorder %s16, 1
    %p123 = por %p121, %p122
    %p124 = scmp.ne.s32.totalorder %s113, %s114
    %p125 = scmp.eq.s32.totalorder %s16, 0
    %p126 = por %p124, %p125
    %p127 = scmp.ne.s32.totalorder %s113, %s114
    %p128 = scmp.eq.s32.totalorder %s17, 1
    %p129 = por %p127, %p128
    %p131 = scmp.ne.s32.totalorder %s114, %s130
    %p132 = scmp.eq.s32.totalorder %s17, 0
    %p133 = por %p131, %p132
    %s134 = ssub.s32 %s11, %s18
    %p135 = scmp.eq.s32.totalorder %s134, 0
    %s137 = sadd.s32 %s136, 1
    %s138 = scalar_select %p135, %s136, %s137
    %p141 = pneg %p135
    %p142 = scmp.eq.s32.totalorder %s11, 1
    %p143 = por %p141, %p142
    %p144 = scmp.ne.s32.totalorder %s136, %s139
    %p145 = scmp.eq.s32.totalorder %s11, 0
    %p146 = por %p144, %p145
    %p147 = scmp.ne.s32.totalorder %s136, %s139
    %p148 = scmp.eq.s32.totalorder %s16, 1
    %p149 = por %p147, %p148
    %p150 = scmp.ne.s32.totalorder %s139, %s140
    %p151 = scmp.eq.s32.totalorder %s16, 0
    %p152 = por %p150, %p151
    %p153 = scmp.ne.s32.totalorder %s139, %s140
    %p154 = scmp.eq.s32.totalorder %s17, 1
    %p155 = por %p153, %p154
    %p157 = scmp.ne.s32.totalorder %s140, %s156
    %p158 = scmp.eq.s32.totalorder %s17, 0
    %p159 = por %p157, %p158
    %p160 = scmp.le.s32.totalorder 1, %s11
    %p161 = scmp.lt.s32.totalorder %s11, 3
    %p162 = pnand %p160, %p161
    %p163 = pneg %p162
    // Predicated region
    $region9: #{elman_layer_forward.1} parent=5 // pred_check
      _
    $region10: #{elman_layer_forward.1} parent=5 // pred_check_branch
      %165 = sbr.rel (%p162) target = $region12
    $region11: #{elman_layer_forward.1} parent=5 // pred_region
      %s166 = ssub.s32 %s11, 1
      // Predicated region
      $region13: #{elman_layer_forward.1} parent=11 // pred_check
        %p167 = pneg %p58
      $region14: #{elman_layer_forward.1} parent=11 // pred_check_branch
        %169 = sbr.rel (%p167) target = $region16
      $region15: #{elman_layer_forward.1} parent=11 // pred_region
        _
      $region16: #{elman_layer_forward.1} parent=11 // pred_fallthru
        _
      // Predicated region
      $region17: #{elman_layer_forward.1} parent=11 // pred_check
        %p170 = pneg %p79
      $region18: #{elman_layer_forward.1} parent=11 // pred_check_branch
        %172 = sbr.rel (%p170) target = $region20
      $region19: #{elman_layer_forward.1} parent=11 // pred_region
        _
      $region20: #{elman_layer_forward.1} parent=11 // pred_fallthru
        _
      // Predicated region
      $region21: #{elman_layer_forward.1} parent=11 // pred_check
        %p173 = pneg %p100
      $region22: #{elman_layer_forward.1} parent=11 // pred_check_branch
        %175 = sbr.rel (%p173) target = $region24
      $region23: #{elman_layer_forward.1} parent=11 // pred_region
        _
      $region24: #{elman_layer_forward.1} parent=11 // pred_fallthru
        _
    $region12: #{elman_layer_forward.1} parent=5 // pred_fallthru
      _
    %p176 = scmp.lt.s32.totalorder %s11, 2
    // Predicated region
    $region25: #{elman_layer_forward.1} parent=5 // pred_check
      %p177 = pneg %p176
    $region26: #{elman_layer_forward.1} parent=5 // pred_check_branch
      %179 = sbr.rel (%p177) target = $region28
    $region27: #{elman_layer_forward.1} parent=5 // pred_region
      // Predicated region
      $region29: #{elman_layer_forward.1} parent=27 // pred_check
        %p180 = pneg %p31
      $region30: #{elman_layer_forward.1} parent=27 // pred_check_branch
        %182 = sbr.rel (%p180) target = $region32
      $region31: #{elman_layer_forward.1} parent=27 // pred_region
        %p183 = scmp.lt.s32.totalorder %s11, 1
        %s184 = scalar_select %p183, %s11, 1
        %s185 = smul.addr %s184, 2
        %s186 = smul.addr %s185, 8
        %s187 = scalar_lea.vmem %s0, %s186
      $region32: #{elman_layer_forward.1} parent=27 // pred_fallthru
        _
      // Predicated region
      $region33: #{elman_layer_forward.1} parent=27 // pred_check
        %p188 = pneg %p120
      $region34: #{elman_layer_forward.1} parent=27 // pred_check_branch
        %190 = sbr.rel (%p188) target = $region36
      $region35: #{elman_layer_forward.1} parent=27 // pred_region
        %p191 = scmp.lt.s32.totalorder %s11, 1
        %s192 = scalar_select %p191, %s11, 1
        %s193 = scalar_lea.vmem %s4, %s192
      $region36: #{elman_layer_forward.1} parent=27 // pred_fallthru
        _
    $region28: #{elman_layer_forward.1} parent=5 // pred_fallthru
      _
    %p194 = scmp.le.s32.totalorder 1, %s11
    %p195 = scmp.lt.s32.totalorder %s11, 3
    %p196 = pnand %p194, %p195
    %p197 = pneg %p196
    // Predicated region
    $region37: #{elman_layer_forward.1} parent=5 // pred_check
      _
    $region38: #{elman_layer_forward.1} parent=5 // pred_check_branch
      %199 = sbr.rel (%p196) target = $region40
    $region39: #{elman_layer_forward.1} parent=5 // pred_region
      %s200 = ssub.s32 %s11, 1
      %p201 = scmp.lt.s32.totalorder %s16, 1
      %s202 = scalar_select %p201, %s16, 1
      %s203 = smul.addr %s202, 2
      %s204 = smul.addr %s203, 8
      %s205 = scalar_lea.vmem %s0, %s204
      %p206 = pneg %p37
      %p207 = pneg %p34
      %p208 = pneg %p58
      %p209 = pneg %p55
      %p210 = pneg %p79
      %p211 = pneg %p76
      %p212 = pneg %p100
      %p213 = pneg %p97
      %p214 = scmp.lt.s32.totalorder %s16, 1
      %s215 = scalar_select %p214, %s16, 1
      %s216 = scalar_lea.vmem %s4, %s215
      %p217 = pneg %p126
      %p218 = pneg %p123
      %p219 = pneg %p152
      %p220 = pneg %p149
      %p221 = scmp.lt.s32.totalorder %s16, 1
      %s222 = scalar_select %p221, %s16, 1
      %s223 = smul.addr %s222, 2
      %s224 = smul.addr %s223, 8
      %s225 = scalar_lea.vmem %s5, %s224
      %p226 = scmp.lt.s32.totalorder %s16, 1
      %s227 = scalar_select %p226, %s16, 1
      %s228 = smul.addr %s227, 2
      %s229 = smul.addr %s228, 8
      %s230 = scalar_lea.vmem %s0, %s229
      %p231 = scmp.lt.s32.totalorder %s16, 1
      %s232 = scalar_select %p231, %s16, 1
      %s233 = scalar_lea.vmem %s4, %s232
      %p234 = scmp.lt.s32.totalorder %s16, 1
      %s235 = scalar_select %p234, %s16, 1
      %s236 = smul.addr %s235, 2
      %s237 = smul.addr %s236, 8
      %s238 = scalar_lea.vmem %s5, %s237
      %v239 = vld [vmem:[%s230] sm:$0xff]
      %v240 = vld [vmem:[%s230 + $0x8] sm:$0xff]
      %v241 = vld [vmem:[%s1] sm:$0xff]
      %v242 = vld [vmem:[%s1 + $0x8] sm:$0xff]
      %v243 = vld [vmem:[%s1 + $0x10] sm:$0xff]
      %v244 = vld [vmem:[%s1 + $0x18] sm:$0xff]
      %v245 = vld [vmem:[%s3] sm:$0x1]
      %v247 = vlaneseq
      %v248 = vshrl.u32 %v247, 7
      %v249 = vsub.s32 0, %v248
      %v250 = vrot.slane %v245, %v249
      %vm252 = vcmask 261120
      %v254 = vsel %vm252, %v239, 0
      %v257 = vsel %vm252, %v240, 0
      %259 = vmatprep.subr.mxu0 0.0
      %260 = vmatpush1.msra.mxu0 0.0
      %261 = vmatprep.subr.mxu0 0.0
      %262 = vmatpush1.msra.mxu0 0.0
      %263 = vmatprep.subr.mxu0 0.0
      %264 = vmatpush1.msra.mxu0 0.0
      %265 = vmatprep.subr.mxu0 0.0
      %266 = vmatpush1.msra.mxu0 0.0
      %267 = vmatprep.subr.mxu0 0.0
      %268 = vmatpush1.msra.mxu0 0.0
      %269 = vmatprep.subr.mxu0 0.0
      %270 = vmatpush1.msra.mxu0 0.0
      %271 = vmatprep.subr.mxu0 0.0
      %272 = vmatpush1.msra.mxu0 0.0
      %273 = vmatprep.subr.mxu0 0.0
      %274 = vmatpush1.msra.mxu0 0.0
      %275 = vmatprep.subr.mxu0 0.0
      %276 = vmatpush1.msra.mxu0 0.0
      %277 = vmatprep.subr.mxu0 0.0
      %278 = vmatpush1.msra.mxu0 0.0
      %279 = vmatprep.subr.mxu0 0.0
      %280 = vmatpush1.msra.mxu0 0.0
      %281 = vmatprep.subr.mxu0 0.0
      %282 = vmatpush1.msra.mxu0 0.0
      %283 = vmatprep.subr.mxu0 0.0
      %284 = vmatpush1.msra.mxu0 %v244
      %285 = vmatprep.subr.mxu0 0.0
      %286 = vmatpush1.msra.mxu0 %v243
      %287 = vmatprep.subr.mxu0 0.0
      %288 = vmatpush1.msra.mxu0 %v242
      %289 = vmatprep.subr.mxu0 0.0
      %290 = vmatpush1.msra.mxu0 %v241
      %291 = vmatprep.subr.mxu0 0.0
      %292 = vmatpush2.msra.mxu0 0.0
      %293 = vmatprep.subr.mxu0 0.0
      %294 = vmatpush2.msra.mxu0 0.0
      %295 = vmatprep.subr.mxu0 0.0
      %296 = vmatpush2.msra.mxu0 0.0
      %297 = vmatprep.subr.mxu0 0.0
      %298 = vmatpush2.msra.mxu0 0.0
      %299 = vmatprep.subr.mxu0 0.0
      %300 = vmatpush2.msra.mxu0 0.0
      %301 = vmatprep.subr.mxu0 0.0
      %302 = vmatpush2.msra.mxu0 0.0
      %303 = vmatprep.subr.mxu0 0.0
      %304 = vmatpush2.msra.mxu0 0.0
      %305 = vmatprep.subr.mxu0 0.0
      %306 = vmatpush2.msra.mxu0 0.0
      %307 = vmatprep.subr.mxu0 0.0
      %308 = vmatpush2.msra.mxu0 0.0
      %309 = vmatprep.subr.mxu0 0.0
      %310 = vmatpush2.msra.mxu0 0.0
      %311 = vmatprep.subr.mxu0 0.0
      %312 = vmatpush2.msra.mxu0 0.0
      %313 = vmatprep.subr.mxu0 0.0
      %314 = vmatpush2.msra.mxu0 0.0
      %315 = vmatprep.subr.mxu0 0.0
      %316 = vmatpush2.msra.mxu0 0.0
      %317 = vmatprep.subr.mxu0 0.0
      %318 = vmatpush2.msra.mxu0 0.0
      %319 = vmatprep.subr.mxu0 0.0
      %320 = vmatpush2.msra.mxu0 0.0
      %321 = vmatprep.subr.mxu0 0.0
      %322 = vmatpush2.msra.mxu0 0.0
      %323 = vmatprep.mubr.f32.mxu0 0.0
      %324 = vmatmul.mubr.f32.gmra.mxu0 %v254
      %v325 = vpop.f32.mrf.mxu0
      %v326 = vadd.f32 %v250, %v325
      %v327 = vpop.f32.mrf.mxu0
      %328 = vmatprep.mubr.f32.mxu0 0.0
      %329 = vmatmul.mubr.f32.gmra.mxu0 %v257
      %v330 = vpop.f32.mrf.mxu0
      %v331 = vadd.f32 %v250, %v330
      %v332 = vpop.f32.mrf.mxu0
      %333 = vdwg.mxu0
      %334 = vst.msk [vmem:[#allocation2] sm:$0xff] %vm252, %v326
      %335 = vst.msk [vmem:[#allocation2 + $0x8] sm:$0xff] %vm252, %v331
      %v336 = vld [vmem:[%s233] sm:$0x1]
      %v338 = vlaneseq
      %v339 = vshrl.u32 %v338, 7
      %v340 = vsub.s32 0, %v339
      %v341 = vrot.slane %v336, %v340
      %v342 = vld [vmem:[#allocation2] sm:$0x1]
      %v343 = vld [vmem:[#allocation2 + $0x8] sm:$0x1]
      %v344 = vld [vmem:[%s2] sm:$0xff]
      %v345 = vld [vmem:[%s2 + $0x8] sm:$0xff]
      %v346 = vld [vmem:[%s2 + $0x10] sm:$0xff]
      %v347 = vld [vmem:[%s2 + $0x18] sm:$0xff]
      %v348 = vsel %vm252, %v341, 0
      %350 = vmatprep.subr.mxu0 0.0
      %351 = vmatpush1.msra.mxu0 0.0
      %352 = vmatprep.subr.mxu0 0.0
      %353 = vmatpush1.msra.mxu0 0.0
      %354 = vmatprep.subr.mxu0 0.0
      %355 = vmatpush1.msra.mxu0 0.0
      %356 = vmatprep.subr.mxu0 0.0
      %357 = vmatpush1.msra.mxu0 0.0
      %358 = vmatprep.subr.mxu0 0.0
      %359 = vmatpush1.msra.mxu0 0.0
      %360 = vmatprep.subr.mxu0 0.0
      %361 = vmatpush1.msra.mxu0 0.0
      %362 = vmatprep.subr.mxu0 0.0
      %363 = vmatpush1.msra.mxu0 0.0
      %364 = vmatprep.subr.mxu0 0.0
      %365 = vmatpush1.msra.mxu0 0.0
      %366 = vmatprep.subr.mxu0 0.0
      %367 = vmatpush1.msra.mxu0 0.0
      %368 = vmatprep.subr.mxu0 0.0
      %369 = vmatpush1.msra.mxu0 0.0
      %370 = vmatprep.subr.mxu0 0.0
      %371 = vmatpush1.msra.mxu0 0.0
      %372 = vmatprep.subr.mxu0 0.0
      %373 = vmatpush1.msra.mxu0 0.0
      %374 = vmatprep.subr.mxu0 0.0
      %375 = vmatpush1.msra.mxu0 %v347
      %376 = vmatprep.subr.mxu0 0.0
      %377 = vmatpush1.msra.mxu0 %v346
      %378 = vmatprep.subr.mxu0 0.0
      %379 = vmatpush1.msra.mxu0 %v345
      %380 = vmatprep.subr.mxu0 0.0
      %381 = vmatpush1.msra.mxu0 %v344
      %382 = vmatprep.subr.mxu0 0.0
      %383 = vmatpush2.msra.mxu0 0.0
      %384 = vmatprep.subr.mxu0 0.0
      %385 = vmatpush2.msra.mxu0 0.0
      %386 = vmatprep.subr.mxu0 0.0
      %387 = vmatpush2.msra.mxu0 0.0
      %388 = vmatprep.subr.mxu0 0.0
      %389 = vmatpush2.msra.mxu0 0.0
      %390 = vmatprep.subr.mxu0 0.0
      %391 = vmatpush2.msra.mxu0 0.0
      %392 = vmatprep.subr.mxu0 0.0
      %393 = vmatpush2.msra.mxu0 0.0
      %394 = vmatprep.subr.mxu0 0.0
      %395 = vmatpush2.msra.mxu0 0.0
      %396 = vmatprep.subr.mxu0 0.0
      %397 = vmatpush2.msra.mxu0 0.0
      %398 = vmatprep.subr.mxu0 0.0
      %399 = vmatpush2.msra.mxu0 0.0
      %400 = vmatprep.subr.mxu0 0.0
      %401 = vmatpush2.msra.mxu0 0.0
      %402 = vmatprep.subr.mxu0 0.0
      %403 = vmatpush2.msra.mxu0 0.0
      %404 = vmatprep.subr.mxu0 0.0
      %405 = vmatpush2.msra.mxu0 0.0
      %406 = vmatprep.subr.mxu0 0.0
      %407 = vmatpush2.msra.mxu0 0.0
      %408 = vmatprep.subr.mxu0 0.0
      %409 = vmatpush2.msra.mxu0 0.0
      %410 = vmatprep.subr.mxu0 0.0
      %411 = vmatpush2.msra.mxu0 0.0
      %412 = vmatprep.subr.mxu0 0.0
      %413 = vmatpush2.msra.mxu0 0.0
      %414 = vmatprep.mubr.f32.mxu0 0.0
      %415 = vmatmul.mubr.f32.gmra.mxu0 %v348
      %v416 = vpop.f32.mrf.mxu0
      %v417 = vadd.f32 0.0, %v416
      %v418 = vpop.f32.mrf.mxu0
      %419 = vdwg.mxu0
      %v421 = vrot.slane %v417, 1
      %v424 = vadd.f32 %v342, %v417
      %v425 = vadd.f32 %v343, %v421
      %v426 = vtanh.pop %v424
      %v427 = vtanh.pop %v425
      %vm428 = vcmask 253952
      %429 = vst.msk [vmem:[%s238] sm:$0x1] %vm428, %v426
      %430 = vst.msk [vmem:[%s238 + $0x8] sm:$0x1] %vm428, %v427
      %v431 = vld [vmem:[#allocation2 + $0x1] sm:$0x1]
      %v432 = vld [vmem:[#allocation2 + $0x9] sm:$0x1]
      %v433 = vld [vmem:[%s2] sm:$0xff]
      %v434 = vld [vmem:[%s2 + $0x8] sm:$0xff]
      %v435 = vld [vmem:[%s2 + $0x10] sm:$0xff]
      %v436 = vld [vmem:[%s2 + $0x18] sm:$0xff]
      %v439 = vrot.slane %v427, 7
      %vm440 = vcmask 1041409
      %v441 = vsel %vm440, %v439, %v426
      %v442 = vsel %vm252, %v441, 0
      %444 = vmatprep.subr.mxu0 0.0
      %445 = vmatpush1.msra.mxu0 0.0
      %446 = vmatprep.subr.mxu0 0.0
      %447 = vmatpush1.msra.mxu0 0.0
      %448 = vmatprep.subr.mxu0 0.0
      %449 = vmatpush1.msra.mxu0 0.0
      %450 = vmatprep.subr.mxu0 0.0
      %451 = vmatpush1.msra.mxu0 0.0
      %452 = vmatprep.subr.mxu0 0.0
      %453 = vmatpush1.msra.mxu0 0.0
      %454 = vmatprep.subr.mxu0 0.0
      %455 = vmatpush1.msra.mxu0 0.0
      %456 = vmatprep.subr.mxu0 0.0
      %457 = vmatpush1.msra.mxu0 0.0
      %458 = vmatprep.subr.mxu0 0.0
      %459 = vmatpush1.msra.mxu0 0.0
      %460 = vmatprep.subr.mxu0 0.0
      %461 = vmatpush1.msra.mxu0 0.0
      %462 = vmatprep.subr.mxu0 0.0
      %463 = vmatpush1.msra.mxu0 0.0
      %464 = vmatprep.subr.mxu0 0.0
      %465 = vmatpush1.msra.mxu0 0.0
      %466 = vmatprep.subr.mxu0 0.0
      %467 = vmatpush1.msra.mxu0 0.0
      %468 = vmatprep.subr.mxu0 0.0
      %469 = vmatpush1.msra.mxu0 %v436
      %470 = vmatprep.subr.mxu0 0.0
      %471 = vmatpush1.msra.mxu0 %v435
      %472 = vmatprep.subr.mxu0 0.0
      %473 = vmatpush1.msra.mxu0 %v434
      %474 = vmatprep.subr.mxu0 0.0
      %475 = vmatpush1.msra.mxu0 %v433
      %476 = vmatprep.subr.mxu0 0.0
      %477 = vmatpush2.msra.mxu0 0.0
      %478 = vmatprep.subr.mxu0 0.0
      %479 = vmatpush2.msra.mxu0 0.0
      %480 = vmatprep.subr.mxu0 0.0
      %481 = vmatpush2.msra.mxu0 0.0
      %482 = vmatprep.subr.mxu0 0.0
      %483 = vmatpush2.msra.mxu0 0.0
      %484 = vmatprep.subr.mxu0 0.0
      %485 = vmatpush2.msra.mxu0 0.0
      %486 = vmatprep.subr.mxu0 0.0
      %487 = vmatpush2.msra.mxu0 0.0
      %488 = vmatprep.subr.mxu0 0.0
      %489 = vmatpush2.msra.mxu0 0.0
      %490 = vmatprep.subr.mxu0 0.0
      %491 = vmatpush2.msra.mxu0 0.0
      %492 = vmatprep.subr.mxu0 0.0
      %493 = vmatpush2.msra.mxu0 0.0
      %494 = vmatprep.subr.mxu0 0.0
      %495 = vmatpush2.msra.mxu0 0.0
      %496 = vmatprep.subr.mxu0 0.0
      %497 = vmatpush2.msra.mxu0 0.0
      %498 = vmatprep.subr.mxu0 0.0
      %499 = vmatpush2.msra.mxu0 0.0
      %500 = vmatprep.subr.mxu0 0.0
      %501 = vmatpush2.msra.mxu0 0.0
      %502 = vmatprep.subr.mxu0 0.0
      %503 = vmatpush2.msra.mxu0 0.0
      %504 = vmatprep.subr.mxu0 0.0
      %505 = vmatpush2.msra.mxu0 0.0
      %506 = vmatprep.subr.mxu0 0.0
      %507 = vmatpush2.msra.mxu0 0.0
      %508 = vmatprep.mubr.f32.mxu0 0.0
      %509 = vmatmul.mubr.f32.gmra.mxu0 %v442
      %v510 = vpop.f32.mrf.mxu0
      %v511 = vadd.f32 0.0, %v510
      %v512 = vpop.f32.mrf.mxu0
      %513 = vdwg.mxu0
      %v515 = vrot.slane %v511, 1
      %v518 = vadd.f32 %v431, %v511
      %v519 = vadd.f32 %v432, %v515
      %v520 = vtanh.pop %v518
      %v521 = vtanh.pop %v519
      %522 = vst.msk [vmem:[%s238 + $0x1] sm:$0x1] %vm428, %v520
      %523 = vst.msk [vmem:[%s238 + $0x9] sm:$0x1] %vm428, %v521
      %v524 = vld [vmem:[#allocation2 + $0x2] sm:$0x1]
      %v525 = vld [vmem:[#allocation2 + $0xa] sm:$0x1]
      %v526 = vld [vmem:[%s2] sm:$0xff]
      %v527 = vld [vmem:[%s2 + $0x8] sm:$0xff]
      %v528 = vld [vmem:[%s2 + $0x10] sm:$0xff]
      %v529 = vld [vmem:[%s2 + $0x18] sm:$0xff]
      %v532 = vrot.slane %v521, 7
      %v533 = vsel %vm440, %v532, %v520
      %v534 = vsel %vm252, %v533, 0
      %536 = vmatprep.subr.mxu0 0.0
      %537 = vmatpush1.msra.mxu0 0.0
      %538 = vmatprep.subr.mxu0 0.0
      %539 = vmatpush1.msra.mxu0 0.0
      %540 = vmatprep.subr.mxu0 0.0
      %541 = vmatpush1.msra.mxu0 0.0
      %542 = vmatprep.subr.mxu0 0.0
      %543 = vmatpush1.msra.mxu0 0.0
      %544 = vmatprep.subr.mxu0 0.0
      %545 = vmatpush1.msra.mxu0 0.0
      %546 = vmatprep.subr.mxu0 0.0
      %547 = vmatpush1.msra.mxu0 0.0
      %548 = vmatprep.subr.mxu0 0.0
      %549 = vmatpush1.msra.mxu0 0.0
      %550 = vmatprep.subr.mxu0 0.0
      %551 = vmatpush1.msra.mxu0 0.0
      %552 = vmatprep.subr.mxu0 0.0
      %553 = vmatpush1.msra.mxu0 0.0
      %554 = vmatprep.subr.mxu0 0.0
      %555 = vmatpush1.msra.mxu0 0.0
      %556 = vmatprep.subr.mxu0 0.0
      %557 = vmatpush1.msra.mxu0 0.0
      %558 = vmatprep.subr.mxu0 0.0
      %559 = vmatpush1.msra.mxu0 0.0
      %560 = vmatprep.subr.mxu0 0.0
      %561 = vmatpush1.msra.mxu0 %v529
      %562 = vmatprep.subr.mxu0 0.0
      %563 = vmatpush1.msra.mxu0 %v528
      %564 = vmatprep.subr.mxu0 0.0
      %565 = vmatpush1.msra.mxu0 %v527
      %566 = vmatprep.subr.mxu0 0.0
      %567 = vmatpush1.msra.mxu0 %v526
      %568 = vmatprep.subr.mxu0 0.0
      %569 = vmatpush2.msra.mxu0 0.0
      %570 = vmatprep.subr.mxu0 0.0
      %571 = vmatpush2.msra.mxu0 0.0
      %572 = vmatprep.subr.mxu0 0.0
      %573 = vmatpush2.msra.mxu0 0.0
      %574 = vmatprep.subr.mxu0 0.0
      %575 = vmatpush2.msra.mxu0 0.0
      %576 = vmatprep.subr.mxu0 0.0
      %577 = vmatpush2.msra.mxu0 0.0
      %578 = vmatprep.subr.mxu0 0.0
      %579 = vmatpush2.msra.mxu0 0.0
      %580 = vmatprep.subr.mxu0 0.0
      %581 = vmatpush2.msra.mxu0 0.0
      %582 = vmatprep.subr.mxu0 0.0
      %583 = vmatpush2.msra.mxu0 0.0
      %584 = vmatprep.subr.mxu0 0.0
      %585 = vmatpush2.msra.mxu0 0.0
      %586 = vmatprep.subr.mxu0 0.0
      %587 = vmatpush2.msra.mxu0 0.0
      %588 = vmatprep.subr.mxu0 0.0
      %589 = vmatpush2.msra.mxu0 0.0
      %590 = vmatprep.subr.mxu0 0.0
      %591 = vmatpush2.msra.mxu0 0.0
      %592 = vmatprep.subr.mxu0 0.0
      %593 = vmatpush2.msra.mxu0 0.0
      %594 = vmatprep.subr.mxu0 0.0
      %595 = vmatpush2.msra.mxu0 0.0
      %596 = vmatprep.subr.mxu0 0.0
      %597 = vmatpush2.msra.mxu0 0.0
      %598 = vmatprep.subr.mxu0 0.0
      %599 = vmatpush2.msra.mxu0 0.0
      %600 = vmatprep.mubr.f32.mxu0 0.0
      %601 = vmatmul.mubr.f32.gmra.mxu0 %v534
      %v602 = vpop.f32.mrf.mxu0
      %v603 = vadd.f32 0.0, %v602
      %v604 = vpop.f32.mrf.mxu0
      %605 = vdwg.mxu0
      %v607 = vrot.slane %v603, 1
      %v610 = vadd.f32 %v524, %v603
      %v611 = vadd.f32 %v525, %v607
      %v612 = vtanh.pop %v610
      %v613 = vtanh.pop %v611
      %614 = vst.msk [vmem:[%s238 + $0x2] sm:$0x1] %vm428, %v612
      %615 = vst.msk [vmem:[%s238 + $0xa] sm:$0x1] %vm428, %v613
      %v616 = vld [vmem:[#allocation2 + $0x3] sm:$0x1]
      %v617 = vld [vmem:[#allocation2 + $0xb] sm:$0x1]
      %v618 = vld [vmem:[%s2] sm:$0xff]
      %v619 = vld [vmem:[%s2 + $0x8] sm:$0xff]
      %v620 = vld [vmem:[%s2 + $0x10] sm:$0xff]
      %v621 = vld [vmem:[%s2 + $0x18] sm:$0xff]
      %v624 = vrot.slane %v613, 7
      %v625 = vsel %vm440, %v624, %v612
      %v626 = vsel %vm252, %v625, 0
      %628 = vmatprep.subr.mxu0 0.0
      %629 = vmatpush1.msra.mxu0 0.0
      %630 = vmatprep.subr.mxu0 0.0
      %631 = vmatpush1.msra.mxu0 0.0
      %632 = vmatprep.subr.mxu0 0.0
      %633 = vmatpush1.msra.mxu0 0.0
      %634 = vmatprep.subr.mxu0 0.0
      %635 = vmatpush1.msra.mxu0 0.0
      %636 = vmatprep.subr.mxu0 0.0
      %637 = vmatpush1.msra.mxu0 0.0
      %638 = vmatprep.subr.mxu0 0.0
      %639 = vmatpush1.msra.mxu0 0.0
      %640 = vmatprep.subr.mxu0 0.0
      %641 = vmatpush1.msra.mxu0 0.0
      %642 = vmatprep.subr.mxu0 0.0
      %643 = vmatpush1.msra.mxu0 0.0
      %644 = vmatprep.subr.mxu0 0.0
      %645 = vmatpush1.msra.mxu0 0.0
      %646 = vmatprep.subr.mxu0 0.0
      %647 = vmatpush1.msra.mxu0 0.0
      %648 = vmatprep.subr.mxu0 0.0
      %649 = vmatpush1.msra.mxu0 0.0
      %650 = vmatprep.subr.mxu0 0.0
      %651 = vmatpush1.msra.mxu0 0.0
      %652 = vmatprep.subr.mxu0 0.0
      %653 = vmatpush1.msra.mxu0 %v621
      %654 = vmatprep.subr.mxu0 0.0
      %655 = vmatpush1.msra.mxu0 %v620
      %656 = vmatprep.subr.mxu0 0.0
      %657 = vmatpush1.msra.mxu0 %v619
      %658 = vmatprep.subr.mxu0 0.0
      %659 = vmatpush1.msra.mxu0 %v618
      %660 = vmatprep.subr.mxu0 0.0
      %661 = vmatpush2.msra.mxu0 0.0
      %662 = vmatprep.subr.mxu0 0.0
      %663 = vmatpush2.msra.mxu0 0.0
      %664 = vmatprep.subr.mxu0 0.0
      %665 = vmatpush2.msra.mxu0 0.0
      %666 = vmatprep.subr.mxu0 0.0
      %667 = vmatpush2.msra.mxu0 0.0
      %668 = vmatprep.subr.mxu0 0.0
      %669 = vmatpush2.msra.mxu0 0.0
      %670 = vmatprep.subr.mxu0 0.0
      %671 = vmatpush2.msra.mxu0 0.0
      %672 = vmatprep.subr.mxu0 0.0
      %673 = vmatpush2.msra.mxu0 0.0
      %674 = vmatprep.subr.mxu0 0.0
      %675 = vmatpush2.msra.mxu0 0.0
      %676 = vmatprep.subr.mxu0 0.0
      %677 = vmatpush2.msra.mxu0 0.0
      %678 = vmatprep.subr.mxu0 0.0
      %679 = vmatpush2.msra.mxu0 0.0
      %680 = vmatprep.subr.mxu0 0.0
      %681 = vmatpush2.msra.mxu0 0.0
      %682 = vmatprep.subr.mxu0 0.0
      %683 = vmatpush2.msra.mxu0 0.0
      %684 = vmatprep.subr.mxu0 0.0
      %685 = vmatpush2.msra.mxu0 0.0
      %686 = vmatprep.subr.mxu0 0.0
      %687 = vmatpush2.msra.mxu0 0.0
      %688 = vmatprep.subr.mxu0 0.0
      %689 = vmatpush2.msra.mxu0 0.0
      %690 = vmatprep.subr.mxu0 0.0
      %691 = vmatpush2.msra.mxu0 0.0
      %692 = vmatprep.mubr.f32.mxu0 0.0
      %693 = vmatmul.mubr.f32.gmra.mxu0 %v626
      %v694 = vpop.f32.mrf.mxu0
      %v695 = vadd.f32 0.0, %v694
      %v696 = vpop.f32.mrf.mxu0
      %697 = vdwg.mxu0
      %v699 = vrot.slane %v695, 1
      %v702 = vadd.f32 %v616, %v695
      %v703 = vadd.f32 %v617, %v699
      %v704 = vtanh.pop %v702
      %v705 = vtanh.pop %v703
      %706 = vst.msk [vmem:[%s238 + $0x3] sm:$0x1] %vm428, %v704
      %707 = vst.msk [vmem:[%s238 + $0xb] sm:$0x1] %vm428, %v705
      %v708 = vld [vmem:[#allocation2 + $0x4] sm:$0x1]
      %v709 = vld [vmem:[#allocation2 + $0xc] sm:$0x1]
      %v710 = vld [vmem:[%s2] sm:$0xff]
      %v711 = vld [vmem:[%s2 + $0x8] sm:$0xff]
      %v712 = vld [vmem:[%s2 + $0x10] sm:$0xff]
      %v713 = vld [vmem:[%s2 + $0x18] sm:$0xff]
      %v716 = vrot.slane %v705, 7
      %v717 = vsel %vm440, %v716, %v704
      %v718 = vsel %vm252, %v717, 0
      %720 = vmatprep.subr.mxu0 0.0
      %721 = vmatpush1.msra.mxu0 0.0
      %722 = vmatprep.subr.mxu0 0.0
      %723 = vmatpush1.msra.mxu0 0.0
      %724 = vmatprep.subr.mxu0 0.0
      %725 = vmatpush1.msra.mxu0 0.0
      %726 = vmatprep.subr.mxu0 0.0
      %727 = vmatpush1.msra.mxu0 0.0
      %728 = vmatprep.subr.mxu0 0.0
      %729 = vmatpush1.msra.mxu0 0.0
      %730 = vmatprep.subr.mxu0 0.0
      %731 = vmatpush1.msra.mxu0 0.0
      %732 = vmatprep.subr.mxu0 0.0
      %733 = vmatpush1.msra.mxu0 0.0
      %734 = vmatprep.subr.mxu0 0.0
      %735 = vmatpush1.msra.mxu0 0.0
      %736 = vmatprep.subr.mxu0 0.0
      %737 = vmatpush1.msra.mxu0 0.0
      %738 = vmatprep.subr.mxu0 0.0
      %739 = vmatpush1.msra.mxu0 0.0
      %740 = vmatprep.subr.mxu0 0.0
      %741 = vmatpush1.msra.mxu0 0.0
      %742 = vmatprep.subr.mxu0 0.0
      %743 = vmatpush1.msra.mxu0 0.0
      %744 = vmatprep.subr.mxu0 0.0
      %745 = vmatpush1.msra.mxu0 %v713
      %746 = vmatprep.subr.mxu0 0.0
      %747 = vmatpush1.msra.mxu0 %v712
      %748 = vmatprep.subr.mxu0 0.0
      %749 = vmatpush1.msra.mxu0 %v711
      %750 = vmatprep.subr.mxu0 0.0
      %751 = vmatpush1.msra.mxu0 %v710
      %752 = vmatprep.subr.mxu0 0.0
      %753 = vmatpush2.msra.mxu0 0.0
      %754 = vmatprep.subr.mxu0 0.0
      %755 = vmatpush2.msra.mxu0 0.0
      %756 = vmatprep.subr.mxu0 0.0
      %757 = vmatpush2.msra.mxu0 0.0
      %758 = vmatprep.subr.mxu0 0.0
      %759 = vmatpush2.msra.mxu0 0.0
      %760 = vmatprep.subr.mxu0 0.0
      %761 = vmatpush2.msra.mxu0 0.0
      %762 = vmatprep.subr.mxu0 0.0
      %763 = vmatpush2.msra.mxu0 0.0
      %764 = vmatprep.subr.mxu0 0.0
      %765 = vmatpush2.msra.mxu0 0.0
      %766 = vmatprep.subr.mxu0 0.0
      %767 = vmatpush2.msra.mxu0 0.0
      %768 = vmatprep.subr.mxu0 0.0
      %769 = vmatpush2.msra.mxu0 0.0
      %770 = vmatprep.subr.mxu0 0.0
      %771 = vmatpush2.msra.mxu0 0.0
      %772 = vmatprep.subr.mxu0 0.0
      %773 = vmatpush2.msra.mxu0 0.0
      %774 = vmatprep.subr.mxu0 0.0
      %775 = vmatpush2.msra.mxu0 0.0
      %776 = vmatprep.subr.mxu0 0.0
      %777 = vmatpush2.msra.mxu0 0.0
      %778 = vmatprep.subr.mxu0 0.0
      %779 = vmatpush2.msra.mxu0 0.0
      %780 = vmatprep.subr.mxu0 0.0
      %781 = vmatpush2.msra.mxu0 0.0
      %782 = vmatprep.subr.mxu0 0.0
      %783 = vmatpush2.msra.mxu0 0.0
      %784 = vmatprep.mubr.f32.mxu0 0.0
      %785 = vmatmul.mubr.f32.gmra.mxu0 %v718
      %v786 = vpop.f32.mrf.mxu0
      %v787 = vadd.f32 0.0, %v786
      %v788 = vpop.f32.mrf.mxu0
      %789 = vdwg.mxu0
      %v791 = vrot.slane %v787, 1
      %v794 = vadd.f32 %v708, %v787
      %v795 = vadd.f32 %v709, %v791
      %v796 = vtanh.pop %v794
      %v797 = vtanh.pop %v795
      %798 = vst.msk [vmem:[%s238 + $0x4] sm:$0x1] %vm428, %v796
      %799 = vst.msk [vmem:[%s238 + $0xc] sm:$0x1] %vm428, %v797
      %v800 = vld [vmem:[#allocation2 + $0x5] sm:$0x1]
      %v801 = vld [vmem:[#allocation2 + $0xd] sm:$0x1]
      %v802 = vld [vmem:[%s2] sm:$0xff]
      %v803 = vld [vmem:[%s2 + $0x8] sm:$0xff]
      %v804 = vld [vmem:[%s2 + $0x10] sm:$0xff]
      %v805 = vld [vmem:[%s2 + $0x18] sm:$0xff]
      %v808 = vrot.slane %v797, 7
      %v809 = vsel %vm440, %v808, %v796
      %v810 = vsel %vm252, %v809, 0
      %812 = vmatprep.subr.mxu0 0.0
      %813 = vmatpush1.msra.mxu0 0.0
      %814 = vmatprep.subr.mxu0 0.0
      %815 = vmatpush1.msra.mxu0 0.0
      %816 = vmatprep.subr.mxu0 0.0
      %817 = vmatpush1.msra.mxu0 0.0
      %818 = vmatprep.subr.mxu0 0.0
      %819 = vmatpush1.msra.mxu0 0.0
      %820 = vmatprep.subr.mxu0 0.0
      %821 = vmatpush1.msra.mxu0 0.0
      %822 = vmatprep.subr.mxu0 0.0
      %823 = vmatpush1.msra.mxu0 0.0
      %824 = vmatprep.subr.mxu0 0.0
      %825 = vmatpush1.msra.mxu0 0.0
      %826 = vmatprep.subr.mxu0 0.0
      %827 = vmatpush1.msra.mxu0 0.0
      %828 = vmatprep.subr.mxu0 0.0
      %829 = vmatpush1.msra.mxu0 0.0
      %830 = vmatprep.subr.mxu0 0.0
      %831 = vmatpush1.msra.mxu0 0.0
      %832 = vmatprep.subr.mxu0 0.0
      %833 = vmatpush1.msra.mxu0 0.0
      %834 = vmatprep.subr.mxu0 0.0
      %835 = vmatpush1.msra.mxu0 0.0
      %836 = vmatprep.subr.mxu0 0.0
      %837 = vmatpush1.msra.mxu0 %v805
      %838 = vmatprep.subr.mxu0 0.0
      %839 = vmatpush1.msra.mxu0 %v804
      %840 = vmatprep.subr.mxu0 0.0
      %841 = vmatpush1.msra.mxu0 %v803
      %842 = vmatprep.subr.mxu0 0.0
      %843 = vmatpush1.msra.mxu0 %v802
      %844 = vmatprep.subr.mxu0 0.0
      %845 = vmatpush2.msra.mxu0 0.0
      %846 = vmatprep.subr.mxu0 0.0
      %847 = vmatpush2.msra.mxu0 0.0
      %848 = vmatprep.subr.mxu0 0.0
      %849 = vmatpush2.msra.mxu0 0.0
      %850 = vmatprep.subr.mxu0 0.0
      %851 = vmatpush2.msra.mxu0 0.0
      %852 = vmatprep.subr.mxu0 0.0
      %853 = vmatpush2.msra.mxu0 0.0
      %854 = vmatprep.subr.mxu0 0.0
      %855 = vmatpush2.msra.mxu0 0.0
      %856 = vmatprep.subr.mxu0 0.0
      %857 = vmatpush2.msra.mxu0 0.0
      %858 = vmatprep.subr.mxu0 0.0
      %859 = vmatpush2.msra.mxu0 0.0
      %860 = vmatprep.subr.mxu0 0.0
      %861 = vmatpush2.msra.mxu0 0.0
      %862 = vmatprep.subr.mxu0 0.0
      %863 = vmatpush2.msra.mxu0 0.0
      %864 = vmatprep.subr.mxu0 0.0
      %865 = vmatpush2.msra.mxu0 0.0
      %866 = vmatprep.subr.mxu0 0.0
      %867 = vmatpush2.msra.mxu0 0.0
      %868 = vmatprep.subr.mxu0 0.0
      %869 = vmatpush2.msra.mxu0 0.0
      %870 = vmatprep.subr.mxu0 0.0
      %871 = vmatpush2.msra.mxu0 0.0
      %872 = vmatprep.subr.mxu0 0.0
      %873 = vmatpush2.msra.mxu0 0.0
      %874 = vmatprep.subr.mxu0 0.0
      %875 = vmatpush2.msra.mxu0 0.0
      %876 = vmatprep.mubr.f32.mxu0 0.0
      %877 = vmatmul.mubr.f32.gmra.mxu0 %v810
      %v878 = vpop.f32.mrf.mxu0
      %v879 = vadd.f32 0.0, %v878
      %v880 = vpop.f32.mrf.mxu0
      %881 = vdwg.mxu0
      %v883 = vrot.slane %v879, 1
      %v886 = vadd.f32 %v800, %v879
      %v887 = vadd.f32 %v801, %v883
      %v888 = vtanh.pop %v886
      %v889 = vtanh.pop %v887
      %890 = vst.msk [vmem:[%s238 + $0x5] sm:$0x1] %vm428, %v888
      %891 = vst.msk [vmem:[%s238 + $0xd] sm:$0x1] %vm428, %v889
      %v892 = vld [vmem:[#allocation2 + $0x6] sm:$0x1]
      %v893 = vld [vmem:[#allocation2 + $0xe] sm:$0x1]
      %v894 = vld [vmem:[%s2] sm:$0xff]
      %v895 = vld [vmem:[%s2 + $0x8] sm:$0xff]
      %v896 = vld [vmem:[%s2 + $0x10] sm:$0xff]
      %v897 = vld [vmem:[%s2 + $0x18] sm:$0xff]
      %v900 = vrot.slane %v889, 7
      %v901 = vsel %vm440, %v900, %v888
      %v902 = vsel %vm252, %v901, 0
      %904 = vmatprep.subr.mxu0 0.0
      %905 = vmatpush1.msra.mxu0 0.0
      %906 = vmatprep.subr.mxu0 0.0
      %907 = vmatpush1.msra.mxu0 0.0
      %908 = vmatprep.subr.mxu0 0.0
      %909 = vmatpush1.msra.mxu0 0.0
      %910 = vmatprep.subr.mxu0 0.0
      %911 = vmatpush1.msra.mxu0 0.0
      %912 = vmatprep.subr.mxu0 0.0
      %913 = vmatpush1.msra.mxu0 0.0
      %914 = vmatprep.subr.mxu0 0.0
      %915 = vmatpush1.msra.mxu0 0.0
      %916 = vmatprep.subr.mxu0 0.0
      %917 = vmatpush1.msra.mxu0 0.0
      %918 = vmatprep.subr.mxu0 0.0
      %919 = vmatpush1.msra.mxu0 0.0
      %920 = vmatprep.subr.mxu0 0.0
      %921 = vmatpush1.msra.mxu0 0.0
      %922 = vmatprep.subr.mxu0 0.0
      %923 = vmatpush1.msra.mxu0 0.0
      %924 = vmatprep.subr.mxu0 0.0
      %925 = vmatpush1.msra.mxu0 0.0
      %926 = vmatprep.subr.mxu0 0.0
      %927 = vmatpush1.msra.mxu0 0.0
      %928 = vmatprep.subr.mxu0 0.0
      %929 = vmatpush1.msra.mxu0 %v897
      %930 = vmatprep.subr.mxu0 0.0
      %931 = vmatpush1.msra.mxu0 %v896
      %932 = vmatprep.subr.mxu0 0.0
      %933 = vmatpush1.msra.mxu0 %v895
      %934 = vmatprep.subr.mxu0 0.0
      %935 = vmatpush1.msra.mxu0 %v894
      %936 = vmatprep.subr.mxu0 0.0
      %937 = vmatpush2.msra.mxu0 0.0
      %938 = vmatprep.subr.mxu0 0.0
      %939 = vmatpush2.msra.mxu0 0.0
      %940 = vmatprep.subr.mxu0 0.0
      %941 = vmatpush2.msra.mxu0 0.0
      %942 = vmatprep.subr.mxu0 0.0
      %943 = vmatpush2.msra.mxu0 0.0
      %944 = vmatprep.subr.mxu0 0.0
      %945 = vmatpush2.msra.mxu0 0.0
      %946 = vmatprep.subr.mxu0 0.0
      %947 = vmatpush2.msra.mxu0 0.0
      %948 = vmatprep.subr.mxu0 0.0
      %949 = vmatpush2.msra.mxu0 0.0
      %950 = vmatprep.subr.mxu0 0.0
      %951 = vmatpush2.msra.mxu0 0.0
      %952 = vmatprep.subr.mxu0 0.0
      %953 = vmatpush2.msra.mxu0 0.0
      %954 = vmatprep.subr.mxu0 0.0
      %955 = vmatpush2.msra.mxu0 0.0
      %956 = vmatprep.subr.mxu0 0.0
      %957 = vmatpush2.msra.mxu0 0.0
      %958 = vmatprep.subr.mxu0 0.0
      %959 = vmatpush2.msra.mxu0 0.0
      %960 = vmatprep.subr.mxu0 0.0
      %961 = vmatpush2.msra.mxu0 0.0
      %962 = vmatprep.subr.mxu0 0.0
      %963 = vmatpush2.msra.mxu0 0.0
      %964 = vmatprep.subr.mxu0 0.0
      %965 = vmatpush2.msra.mxu0 0.0
      %966 = vmatprep.subr.mxu0 0.0
      %967 = vmatpush2.msra.mxu0 0.0
      %968 = vmatprep.mubr.f32.mxu0 0.0
      %969 = vmatmul.mubr.f32.gmra.mxu0 %v902
      %v970 = vpop.f32.mrf.mxu0
      %v971 = vadd.f32 0.0, %v970
      %v972 = vpop.f32.mrf.mxu0
      %973 = vdwg.mxu0
      %v975 = vrot.slane %v971, 1
      %v978 = vadd.f32 %v892, %v971
      %v979 = vadd.f32 %v893, %v975
      %v980 = vtanh.pop %v978
      %v981 = vtanh.pop %v979
      %982 = vst.msk [vmem:[%s238 + $0x6] sm:$0x1] %vm428, %v980
      %983 = vst.msk [vmem:[%s238 + $0xe] sm:$0x1] %vm428, %v981
      %v984 = vld [vmem:[#allocation2 + $0x7] sm:$0x1]
      %v985 = vld [vmem:[#allocation2 + $0xf] sm:$0x1]
      %v986 = vld [vmem:[%s2] sm:$0xff]
      %v987 = vld [vmem:[%s2 + $0x8] sm:$0xff]
      %v988 = vld [vmem:[%s2 + $0x10] sm:$0xff]
      %v989 = vld [vmem:[%s2 + $0x18] sm:$0xff]
      %v992 = vrot.slane %v981, 7
      %v993 = vsel %vm440, %v992, %v980
      %v994 = vsel %vm252, %v993, 0
      %996 = vmatprep.subr.mxu0 0.0
      %997 = vmatpush1.msra.mxu0 0.0
      %998 = vmatprep.subr.mxu0 0.0
      %999 = vmatpush1.msra.mxu0 0.0
      %1000 = vmatprep.subr.mxu0 0.0
      %1001 = vmatpush1.msra.mxu0 0.0
      %1002 = vmatprep.subr.mxu0 0.0
      %1003 = vmatpush1.msra.mxu0 0.0
      %1004 = vmatprep.subr.mxu0 0.0
      %1005 = vmatpush1.msra.mxu0 0.0
      %1006 = vmatprep.subr.mxu0 0.0
      %1007 = vmatpush1.msra.mxu0 0.0
      %1008 = vmatprep.subr.mxu0 0.0
      %1009 = vmatpush1.msra.mxu0 0.0
      %1010 = vmatprep.subr.mxu0 0.0
      %1011 = vmatpush1.msra.mxu0 0.0
      %1012 = vmatprep.subr.mxu0 0.0
      %1013 = vmatpush1.msra.mxu0 0.0
      %1014 = vmatprep.subr.mxu0 0.0
      %1015 = vmatpush1.msra.mxu0 0.0
      %1016 = vmatprep.subr.mxu0 0.0
      %1017 = vmatpush1.msra.mxu0 0.0
      %1018 = vmatprep.subr.mxu0 0.0
      %1019 = vmatpush1.msra.mxu0 0.0
      %1020 = vmatprep.subr.mxu0 0.0
      %1021 = vmatpush1.msra.mxu0 %v989
      %1022 = vmatprep.subr.mxu0 0.0
      %1023 = vmatpush1.msra.mxu0 %v988
      %1024 = vmatprep.subr.mxu0 0.0
      %1025 = vmatpush1.msra.mxu0 %v987
      %1026 = vmatprep.subr.mxu0 0.0
      %1027 = vmatpush1.msra.mxu0 %v986
      %1028 = vmatprep.subr.mxu0 0.0
      %1029 = vmatpush2.msra.mxu0 0.0
      %1030 = vmatprep.subr.mxu0 0.0
      %1031 = vmatpush2.msra.mxu0 0.0
      %1032 = vmatprep.subr.mxu0 0.0
      %1033 = vmatpush2.msra.mxu0 0.0
      %1034 = vmatprep.subr.mxu0 0.0
      %1035 = vmatpush2.msra.mxu0 0.0
      %1036 = vmatprep.subr.mxu0 0.0
      %1037 = vmatpush2.msra.mxu0 0.0
      %1038 = vmatprep.subr.mxu0 0.0
      %1039 = vmatpush2.msra.mxu0 0.0
      %1040 = vmatprep.subr.mxu0 0.0
      %1041 = vmatpush2.msra.mxu0 0.0
      %1042 = vmatprep.subr.mxu0 0.0
      %1043 = vmatpush2.msra.mxu0 0.0
      %1044 = vmatprep.subr.mxu0 0.0
      %1045 = vmatpush2.msra.mxu0 0.0
      %1046 = vmatprep.subr.mxu0 0.0
      %1047 = vmatpush2.msra.mxu0 0.0
      %1048 = vmatprep.subr.mxu0 0.0
      %1049 = vmatpush2.msra.mxu0 0.0
      %1050 = vmatprep.subr.mxu0 0.0
      %1051 = vmatpush2.msra.mxu0 0.0
      %1052 = vmatprep.subr.mxu0 0.0
      %1053 = vmatpush2.msra.mxu0 0.0
      %1054 = vmatprep.subr.mxu0 0.0
      %1055 = vmatpush2.msra.mxu0 0.0
      %1056 = vmatprep.subr.mxu0 0.0
      %1057 = vmatpush2.msra.mxu0 0.0
      %1058 = vmatprep.subr.mxu0 0.0
      %1059 = vmatpush2.msra.mxu0 0.0
      %1060 = vmatprep.mubr.f32.mxu0 0.0
      %1061 = vmatmul.mubr.f32.gmra.mxu0 %v994
      %v1062 = vpop.f32.mrf.mxu0
      %v1063 = vadd.f32 0.0, %v1062
      %v1064 = vpop.f32.mrf.mxu0
      %1065 = vdwg.mxu0
      %v1067 = vrot.slane %v1063, 1
      %v1070 = vadd.f32 %v984, %v1063
      %v1071 = vadd.f32 %v985, %v1067
      %v1072 = vtanh.pop %v1070
      %v1073 = vtanh.pop %v1071
      %1074 = vst.msk [vmem:[%s238 + $0x7] sm:$0x1] %vm428, %v1072
      %1075 = vst.msk [vmem:[%s238 + $0xf] sm:$0x1] %vm428, %v1073
      %p1076 = scmp.lt.s32.totalorder %s16, 1
      %s1077 = scalar_select %p1076, %s16, 1
      %s1078 = smul.addr %s1077, 2
      %s1079 = smul.addr %s1078, 8
      %s1080 = scalar_lea.vmem %s5, %s1079
      // Predicated region
      $region41: #{elman_layer_forward.1} parent=39 // pred_check
        %p1081 = pneg %p149
      $region42: #{elman_layer_forward.1} parent=39 // pred_check_branch
        %1083 = sbr.rel (%p1081) target = $region44
      $region43: #{elman_layer_forward.1} parent=39 // pred_region
        _
      $region44: #{elman_layer_forward.1} parent=39 // pred_fallthru
        _
    $region40: #{elman_layer_forward.1} parent=5 // pred_fallthru
      _
    %p1084 = scmp.le.s32.totalorder 2, %s11
    // Predicated region
    $region45: #{elman_layer_forward.1} parent=5 // pred_check
      %p1085 = pneg %p1084
    $region46: #{elman_layer_forward.1} parent=5 // pred_check_branch
      %1087 = sbr.rel (%p1085) target = $region48
    $region47: #{elman_layer_forward.1} parent=5 // pred_region
      %s1088 = ssub.s32 %s11, 2
      // Predicated region
      $region49: #{elman_layer_forward.1} parent=47 // pred_check
        %p1089 = pneg %p155
      $region50: #{elman_layer_forward.1} parent=47 // pred_check_branch
        %1091 = sbr.rel (%p1089) target = $region52
      $region51: #{elman_layer_forward.1} parent=47 // pred_region
        %p1092 = scmp.lt.s32.totalorder %s17, 1
        %s1093 = scalar_select %p1092, %s17, 1
        %s1094 = smul.addr %s1093, 2
        %s1095 = smul.addr %s1094, 8
        %s1096 = scalar_lea.vmem %s5, %s1095
      $region52: #{elman_layer_forward.1} parent=47 // pred_fallthru
        _
    $region48: #{elman_layer_forward.1} parent=5 // pred_fallthru
      _
  $region6: #{elman_layer_forward.1} parent=0 // loop_footer
    %s15 = sadd.s32 1, %s11
  $region7: #{elman_layer_forward.1} parent=0 // loop_footer_branch
    %10 = sbr.rel target = $region3
  $region8: #{elman_layer_forward.1} parent=0 // loop_exit
    _

</llo_original>
